<compile_context>
chip_gen: v6e
topology: v6e:2x2x1
jax: 0.10.0
libtpu: 0.0.40
codegen_flags: <defaults>
</compile_context>

<pallas_src>
import math

import jax
import jax.numpy as jnp
from jax.experimental import pallas as pl
from jax.experimental.pallas import tpu as pltpu


def _make_pe_table(d_model: int, max_len: int) -> jnp.ndarray:
    """Sinusoidal positional-encoding buffer, shape (max_len, 1, d_model)."""
    position = jnp.arange(max_len, dtype=jnp.float32)[:, None]               # (L, 1)
    div_term = jnp.exp(
        jnp.arange(0, d_model, 2, dtype=jnp.float32) * (-math.log(10000.0) / d_model)
    )                                                                         # (D/2,)
    pe = jnp.zeros((max_len, d_model), dtype=jnp.float32)
    pe = pe.at[:, 0::2].set(jnp.sin(position * div_term))
    pe = pe.at[:, 1::2].set(jnp.cos(position * div_term))
    return pe[:, None, :]                                                     # (L, 1, D)


def _add_kernel(x_ref, pe_ref, o_ref):
    """Eval path: out = x + pe (pe broadcasts over the batch / sublane axis)."""
    o_ref[...] = (x_ref[...] + pe_ref[...]).astype(o_ref.dtype)


def _make_dropout_kernel(p_drop: float):
    """Training path: out = inverted_dropout(x + pe, p_drop)."""
    # drop iff hash_bits < threshold; clamp so p_drop ~1.0 cannot overflow u32.
    threshold = min(int(round(p_drop * float(2**32))), 2**32 - 1)
    scale = 1.0 / (1.0 - p_drop)

    def kernel(seed_ref, x_ref, pe_ref, o_ref):
        # Broadcast-add of the PE slice over the batch (sublane) axis.
        y = x_ref[...].astype(jnp.float32) + pe_ref[...].astype(jnp.float32)  # (tS, B, D)
        shape = y.shape

        # Counter-based hash PRNG: unique stream per element, per grid step,
        # per seed -> no repeated mask across tiles.
        i0 = jax.lax.broadcasted_iota(jnp.int32, shape, 0).astype(jnp.uint32)
        i1 = jax.lax.broadcasted_iota(jnp.int32, shape, 1).astype(jnp.uint32)
        i2 = jax.lax.broadcasted_iota(jnp.int32, shape, 2).astype(jnp.uint32)
        seed_u = seed_ref[0].astype(jnp.uint32)
        tile_u = pl.program_id(0).astype(jnp.uint32)

        h = (i0 * jnp.uint32(0x9E3779B1)) \
            ^ (i1 * jnp.uint32(0x85EBCA77)) \
            ^ (i2 * jnp.uint32(0xC2B2AE3D))
        h = h + seed_u * jnp.uint32(0x27D4EB2F) + tile_u * jnp.uint32(0x165667B1)
        # murmur3 fmix32 finalizer (pure VPU integer ops, TPU + interpret safe)
        h = h ^ (h >> 16)
        h = h * jnp.uint32(0x85EBCA6B)
        h = h ^ (h >> 13)
        h = h * jnp.uint32(0xC2B2AE35)
        h = h ^ (h >> 16)

        keep = h >= jnp.uint32(threshold)
        # TODO(synk): torch's dropout RNG stream cannot be bit-reproduced; this uses a
        # deterministic counter-hash PRNG with identical keep-prob / 1/(1-p) scaling.
        y = jnp.where(keep, y * jnp.float32(scale), jnp.zeros_like(y))
        o_ref[...] = y.astype(o_ref.dtype)

    return kernel


def positional_encoding_forward(
    x: jnp.ndarray,
    pe_table: jnp.ndarray,
    *,
    p_drop: float = 0.1,
    training: bool = True,
    seed: int = 0,
    target_block_bytes: int = 2 * 1024 * 1024,  # ~2 MiB blocks: safe on v5e/v6e/v7x
) -> jnp.ndarray:
    """x: (seq_len, batch, d_model).  Returns same shape/dtype."""
    S, B, D = x.shape
    pe_slice = pe_table[:S]                                                   # (S, 1, D)
    itemsize = jnp.dtype(x.dtype).itemsize

    apply_dropout = training and p_drop > 0.0
    if apply_dropout and p_drop >= 1.0:
        # torch drops everything when p == 1
        return jnp.zeros_like(x)

    # Tile over the sequence axis so each (tS, B, D) activation block is
    # ~target_block_bytes: big enough to amortize per-grid-step overhead,
    # small enough to double-buffer inside the default scoped-VMEM budget
    # (16 MiB v5e / 32 MiB v6e, v7x).
    tS = max(1, min(S, target_block_bytes // max(1, B * D * itemsize)))
    grid = (pl.cdiv(S, tS),)

    x_spec = pl.BlockSpec((tS, B, D), lambda i: (i, 0, 0))
    pe_spec = pl.BlockSpec((tS, 1, D), lambda i: (i, 0, 0))   # un-broadcast PE in HBM
    out_spec = pl.BlockSpec((tS, B, D), lambda i: (i, 0, 0))

    cost = pl.CostEstimate(
        flops=3 * S * B * D,
        transcendentals=0,
        bytes_accessed=2 * S * B * D * itemsize
        + S * D * jnp.dtype(pe_slice.dtype).itemsize,
    )
    cparams = pltpu.CompilerParams(dimension_semantics=("parallel",))

    if apply_dropout:
        kernel = _make_dropout_kernel(float(p_drop))
        seed_arr = jnp.asarray([seed], dtype=jnp.int32)
        return pl.pallas_call(
            kernel,
            out_shape=jax.ShapeDtypeStruct((S, B, D), x.dtype),
            grid=grid,
            in_specs=[
                pl.BlockSpec(memory_space=pltpu.SMEM),   # seed scalar, whole array in SMEM
                x_spec,
                pe_spec,
            ],
            out_specs=out_spec,
            compiler_params=cparams,
            cost_estimate=cost,
        )(seed_arr, x, pe_slice)

    # Eval path: no seed operand, no PRNG work at all (specialized at trace time).
    return pl.pallas_call(
        _add_kernel,
        out_shape=jax.ShapeDtypeStruct((S, B, D), x.dtype),
        grid=grid,
        in_specs=[x_spec, pe_spec],
        out_specs=out_spec,
        compiler_params=cparams,
        cost_estimate=cost,
    )(x, pe_slice)


if __name__ == "__main__":
    # Small shapes consistent with the module: [seq_len, batch, d_model]
    seq_len, batch, d_model = 8, 2, 32
    max_len = 64
    p_drop = 0.1

    key = jax.random.PRNGKey(0)
    x = jax.random.normal(key, (seq_len, batch, d_model), dtype=jnp.float32)
    pe_table = _make_pe_table(d_model, max_len)

    # Training mode (dropout active, deterministic seed).
    out_train = positional_encoding_forward(
        x, pe_table, p_drop=p_drop, training=True, seed=0
    )
    out_train = jax.block_until_ready(out_train)

    # Eval mode (dropout is identity) -> compare against pure-JAX reference.
    out_eval = positional_encoding_forward(
        x, pe_table, p_drop=p_drop, training=False
    )
    out_eval = jax.block_until_ready(out_eval)

    ref = x + pe_table[:seq_len]
    assert out_train.shape == (seq_len, batch, d_model)
    assert jnp.allclose(out_eval, ref, atol=1e-6), "eval-mode mismatch vs reference"

    # Training-mode sanity: every element is either dropped (exactly 0) or the
    # reference value scaled by 1/(1-p).
    scaled = ref / (1.0 - p_drop)
    ok = (out_train == 0.0) | jnp.isclose(out_train, scaled, rtol=1e-5, atol=1e-5)
    assert bool(jnp.all(ok)), "training-mode values are neither dropped nor scaled"

    print("KERNEL_OK")
</pallas_src>

<mosaic_0001>
module attributes {stable_mosaic.version = 11 : i64} {
  func.func @kernel(%arg0: i32, %arg1: memref<1xi32, #tpu.memory_space<smem>>, %arg2: memref<8x2x32xf32, #tpu.memory_space<vmem>>, %arg3: memref<8x1x32xf32, #tpu.memory_space<vmem>>, %arg4: memref<8x2x32xf32, #tpu.memory_space<vmem>>) attributes {dimension_semantics = [#tpu.dimension_semantics<parallel>], iteration_bounds = array<i64: 1>, scalar_prefetch = 0 : i64, scratch_operands = 0 : i64, tpu.core_type = #tpu.core_type<tc>, window_params = [{transform_indices = @transform_0, window_bounds = array<i64: 1>}, {transform_indices = @transform_1, window_bounds = array<i64: 8, 2, 32>}, {transform_indices = @transform_2, window_bounds = array<i64: 8, 1, 32>}, {transform_indices = @transform_3, window_bounds = array<i64: 8, 2, 32>}]} {
    %c0 = arith.constant 0 : index
    %c0_0 = arith.constant 0 : index
    %c0_1 = arith.constant 0 : index
    %0 = vector.load %arg2[%c0, %c0_0, %c0_1] : memref<8x2x32xf32, #tpu.memory_space<vmem>>, vector<8x2x32xf32>
    %c0_2 = arith.constant 0 : index
    %c0_3 = arith.constant 0 : index
    %c0_4 = arith.constant 0 : index
    %1 = vector.load %arg3[%c0_2, %c0_3, %c0_4] : memref<8x1x32xf32, #tpu.memory_space<vmem>>, vector<8x1x32xf32>
    %2 = vector.broadcast %1 : vector<8x1x32xf32> to vector<8x2x32xf32>
    %3 = arith.addf %0, %2 : vector<8x2x32xf32>
    %4 = tpu.iota {dimensions = array<i32: 0>} : vector<8x2x32xi32>
    %5 = tpu.iota {dimensions = array<i32: 1>} : vector<8x2x32xi32>
    %6 = tpu.iota {dimensions = array<i32: 2>} : vector<8x2x32xi32>
    %c0_5 = arith.constant 0 : index
    %7 = memref.load %arg1[%c0_5] : memref<1xi32, #tpu.memory_space<smem>>
    %c-1640531535_i32 = arith.constant -1640531535 : i32
    %8 = vector.broadcast %c-1640531535_i32 : i32 to vector<8x2x32xi32>
    %9 = arith.muli %4, %8 : vector<8x2x32xi32>
    %c-2048144777_i32 = arith.constant -2048144777 : i32
    %10 = vector.broadcast %c-2048144777_i32 : i32 to vector<8x2x32xi32>
    %11 = arith.muli %5, %10 : vector<8x2x32xi32>
    %12 = arith.xori %9, %11 : vector<8x2x32xi32>
    %c-1028477379_i32 = arith.constant -1028477379 : i32
    %13 = vector.broadcast %c-1028477379_i32 : i32 to vector<8x2x32xi32>
    %14 = arith.muli %6, %13 : vector<8x2x32xi32>
    %15 = arith.xori %12, %14 : vector<8x2x32xi32>
    %c668265263_i32 = arith.constant 668265263 : i32
    %16 = arith.muli %7, %c668265263_i32 : i32
    %17 = vector.broadcast %16 : i32 to vector<8x2x32xi32>
    %18 = arith.addi %15, %17 : vector<8x2x32xi32>
    %c374761393_i32 = arith.constant 374761393 : i32
    %19 = arith.muli %arg0, %c374761393_i32 : i32
    %20 = vector.broadcast %19 : i32 to vector<8x2x32xi32>
    %21 = arith.addi %18, %20 : vector<8x2x32xi32>
    %c16_i32 = arith.constant 16 : i32
    %22 = vector.broadcast %c16_i32 : i32 to vector<8x2x32xi32>
    %23 = arith.shrui %21, %22 : vector<8x2x32xi32>
    %24 = arith.xori %21, %23 : vector<8x2x32xi32>
    %c-2048144789_i32 = arith.constant -2048144789 : i32
    %25 = vector.broadcast %c-2048144789_i32 : i32 to vector<8x2x32xi32>
    %26 = arith.muli %24, %25 : vector<8x2x32xi32>
    %c13_i32 = arith.constant 13 : i32
    %27 = vector.broadcast %c13_i32 : i32 to vector<8x2x32xi32>
    %28 = arith.shrui %26, %27 : vector<8x2x32xi32>
    %29 = arith.xori %26, %28 : vector<8x2x32xi32>
    %c-1028477387_i32 = arith.constant -1028477387 : i32
    %30 = vector.broadcast %c-1028477387_i32 : i32 to vector<8x2x32xi32>
    %31 = arith.muli %29, %30 : vector<8x2x32xi32>
    %c16_i32_6 = arith.constant 16 : i32
    %32 = vector.broadcast %c16_i32_6 : i32 to vector<8x2x32xi32>
    %33 = arith.shrui %31, %32 : vector<8x2x32xi32>
    %34 = arith.xori %31, %33 : vector<8x2x32xi32>
    %c429496730_i32 = arith.constant 429496730 : i32
    %35 = vector.broadcast %c429496730_i32 : i32 to vector<8x2x32xi32>
    %36 = arith.cmpi uge, %34, %35 : vector<8x2x32xi32>
    %cst = arith.constant 1.11111116 : f32
    %37 = vector.broadcast %cst : f32 to vector<8x2x32xf32>
    %38 = arith.mulf %3, %37 : vector<8x2x32xf32>
    %cst_7 = arith.constant 0.000000e+00 : f32
    %39 = vector.broadcast %cst_7 : f32 to vector<8x2x32xf32>
    %40 = arith.select %36, %38, %39 : vector<8x2x32xi1>, vector<8x2x32xf32>
    %c0_8 = arith.constant 0 : index
    %c0_9 = arith.constant 0 : index
    %c0_10 = arith.constant 0 : index
    %41 = vector.load %arg4[%c0_8, %c0_9, %c0_10] : memref<8x2x32xf32, #tpu.memory_space<vmem>>, vector<8x2x32xf32>
    tpu.vector_store %arg4[%c0_8, %c0_9, %c0_10], %40 {strides = array<i32>} : memref<8x2x32xf32, #tpu.memory_space<vmem>>, vector<8x2x32xf32>,
    return
  }
  func.func @transform_0(%arg0: i32) -> i32 {
    %c0_i32 = arith.constant 0 : i32
    %c0_i32_0 = arith.constant 0 : i32
    return %c0_i32 : i32
  }
  func.func @transform_1(%arg0: i32) -> (i32, i32, i32) {
    %c0_i32 = arith.constant 0 : i32
    %c0_i32_0 = arith.constant 0 : i32
    %c0_i32_1 = arith.constant 0 : i32
    return %arg0, %c0_i32, %c0_i32_0 : i32, i32, i32
  }
  func.func @transform_2(%arg0: i32) -> (i32, i32, i32) {
    %c0_i32 = arith.constant 0 : i32
    %c0_i32_0 = arith.constant 0 : i32
    %c0_i32_1 = arith.constant 0 : i32
    return %arg0, %c0_i32, %c0_i32_0 : i32, i32, i32
  }
  func.func @transform_3(%arg0: i32) -> (i32, i32, i32) {
    %c0_i32 = arith.constant 0 : i32
    %c0_i32_0 = arith.constant 0 : i32
    %c0_i32_1 = arith.constant 0 : i32
    return %arg0, %c0_i32, %c0_i32_0 : i32, i32, i32
  }
}

</mosaic_0001>

<llo_original>
// kernel: tpu_custom_call.1
$region0: #{tpu_custom_call.1}
  #allocation0 [shape = 'u32[]', space=smem, size = 0x4, offset = 0x4, fixed_abs, tag = 'smem constant byte address 0x4 - core index']
  #allocation1 [shape = 'u32[144,128]{1,0:T(1,128)}', space=vmem, size = 0x12000, scoped, tag = 'internal scratch']
  #allocation2 [shape = 's32[1]{0:T(128)S(6)}', space=smem, size = 0x200, scoped, tag = 'scoped memory for tpu_custom_call.1']
  %s0 = inlined_call_operand.<no memory space> [shape: s32[1], index: 0, kind: input, shape index: {}]
  %s1 = inlined_call_operand.hbm [shape: f32[8,2,32], index: 1, kind: input, shape index: {}]
  %s2 = inlined_call_operand.hbm [shape: f32[8,1,32], index: 2, kind: input, shape index: {}]
  %s3 = inlined_call_operand.hbm [shape: f32[8,2,32], index: 3, kind: output, shape index: {}]
  %s4 = sld [smem:[#allocation0]]
  $region30: #{tpu_custom_call.1} parent=0
    _
  %s6 = ssub.s32 1, %s4
  %s7 = scalar_select 0, %s6, %s4
  %8 = sst [smem:[#allocation2]] %s0
  $region1: #{tpu_custom_call.1} parent=0
    #allocation3 [shape = 'u8[8192]{0}', space=vmem, size = 0x2000, scoped, tag = 'input window, operand 1, single buffered']
    #allocation4 [shape = 's32[1]{0}', space=sflag, size = 0x4, scoped, tag = 'scoped memory for tpu_custom_call.1']
    #allocation5 [shape = 's32[1]{0}', space=sflag, size = 0x4, scoped, tag = 'scoped memory for tpu_custom_call.1']
    #allocation6 [shape = 'u8[4096]{0}', space=vmem, size = 0x1000, scoped, tag = 'input window, operand 2, single buffered']
    #allocation7 [shape = 's32[1]{0}', space=sflag, size = 0x4, scoped, tag = 'scoped memory for tpu_custom_call.1']
    #allocation8 [shape = 'u8[8192]{0}', space=vmem, size = 0x2000, scoped, tag = 'output window, operand 0, single buffered']
    %9 = vsyncpa [#allocation4], 0
    %10 = vsyncpa [#allocation7], 0
    %11 = vsyncpa [#allocation5], 0
    // Predicated region
    $region2: #{tpu_custom_call.1} parent=1 // pred_check
      _
    $region3: #{tpu_custom_call.1} parent=1 // pred_check_branch
      %13 = sbr.rel (0) target = $region5
    $region4: #{tpu_custom_call.1} parent=1 // pred_region
      _
    $region5: #{tpu_custom_call.1} parent=1 // pred_fallthru
      _
    // Predicated region
    $region6: #{tpu_custom_call.1} parent=1 // pred_check
      _
    $region7: #{tpu_custom_call.1} parent=1 // pred_check_branch
      %15 = sbr.rel (0) target = $region9
    $region8: #{tpu_custom_call.1} parent=1 // pred_region
      %s17 = ssub.s32 256, 256
      %18 = vsyncadd [#allocation4], %s17
      %s19 = sshll.u32 [#allocation3], 4
      %s20 = int_to_ptr.vmem [resolvable:$true] %s19
      %25 = dma.hbm_to_vmem [thread:$0]  %s1, 256, %s20, [#allocation4], 32, 32, 2
    $region9: #{tpu_custom_call.1} parent=1 // pred_fallthru
      _
    // Predicated region
    $region10: #{tpu_custom_call.1} parent=1 // pred_check
      _
    $region11: #{tpu_custom_call.1} parent=1 // pred_check_branch
      %27 = sbr.rel (0) target = $region13
    $region12: #{tpu_custom_call.1} parent=1 // pred_region
      %s29 = ssub.s32 128, 128
      %30 = vsyncadd [#allocation7], %s29
      %s31 = sshll.u32 [#allocation6], 4
      %s32 = int_to_ptr.vmem [resolvable:$true] %s31
      %37 = dma.hbm_to_vmem [thread:$0]  %s2, 128, %s32, [#allocation7], 16, 16, 1
    $region13: #{tpu_custom_call.1} parent=1 // pred_fallthru
      _
    // Predicated region
    $region14: #{tpu_custom_call.1} parent=1 // pred_check
      _
    $region15: #{tpu_custom_call.1} parent=1 // pred_check_branch
      %39 = sbr.rel (0) target = $region17
    $region16: #{tpu_custom_call.1} parent=1 // pred_region
      %40 = dma.done [#allocation4], 256
    $region17: #{tpu_custom_call.1} parent=1 // pred_fallthru
      _
    // Predicated region
    $region18: #{tpu_custom_call.1} parent=1 // pred_check
      _
    $region19: #{tpu_custom_call.1} parent=1 // pred_check_branch
      %42 = sbr.rel (0) target = $region21
    $region20: #{tpu_custom_call.1} parent=1 // pred_region
      %43 = dma.done [#allocation7], 128
    $region21: #{tpu_custom_call.1} parent=1 // pred_fallthru
      _
    %v44 = vld [vmem:[#allocation3] sm:$0x3]
    %v45 = vld [vmem:[#allocation3 + $0x2] sm:$0x3]
    %v46 = vld [vmem:[#allocation3 + $0x4] sm:$0x3]
    %v47 = vld [vmem:[#allocation3 + $0x6] sm:$0x3]
    %v48 = vld [vmem:[#allocation3 + $0x8] sm:$0x3]
    %v49 = vld [vmem:[#allocation3 + $0xa] sm:$0x3]
    %v50 = vld [vmem:[#allocation3 + $0xc] sm:$0x3]
    %v51 = vld [vmem:[#allocation3 + $0xe] sm:$0x3]
    %v52 = vld [vmem:[#allocation6] sm:$0x1]
    %v53 = vld [vmem:[#allocation6 + $0x1] sm:$0x1]
    %v54 = vld [vmem:[#allocation6 + $0x2] sm:$0x1]
    %v55 = vld [vmem:[#allocation6 + $0x3] sm:$0x1]
    %v56 = vld [vmem:[#allocation6 + $0x4] sm:$0x1]
    %v57 = vld [vmem:[#allocation6 + $0x5] sm:$0x1]
    %v58 = vld [vmem:[#allocation6 + $0x6] sm:$0x1]
    %v59 = vld [vmem:[#allocation6 + $0x7] sm:$0x1]
    %v68 = vlaneseq
    %v69 = vshrl.u32 %v68, 7
    %v70 = vsub.s32 0, %v69
    %v71 = vrot.slane %v52, %v70
    %v72 = vlaneseq
    %v73 = vshrl.u32 %v72, 7
    %v74 = vsub.s32 0, %v73
    %v75 = vrot.slane %v53, %v74
    %v76 = vlaneseq
    %v77 = vshrl.u32 %v76, 7
    %v78 = vsub.s32 0, %v77
    %v79 = vrot.slane %v54, %v78
    %v80 = vlaneseq
    %v81 = vshrl.u32 %v80, 7
    %v82 = vsub.s32 0, %v81
    %v83 = vrot.slane %v55, %v82
    %v84 = vlaneseq
    %v85 = vshrl.u32 %v84, 7
    %v86 = vsub.s32 0, %v85
    %v87 = vrot.slane %v56, %v86
    %v88 = vlaneseq
    %v89 = vshrl.u32 %v88, 7
    %v90 = vsub.s32 0, %v89
    %v91 = vrot.slane %v57, %v90
    %v92 = vlaneseq
    %v93 = vshrl.u32 %v92, 7
    %v94 = vsub.s32 0, %v93
    %v95 = vrot.slane %v58, %v94
    %v96 = vlaneseq
    %v97 = vshrl.u32 %v96, 7
    %v98 = vsub.s32 0, %v97
    %v99 = vrot.slane %v59, %v98
    %v108 = vadd.f32 %v44, %v71
    %v109 = vadd.f32 %v45, %v75
    %v110 = vadd.f32 %v46, %v79
    %v111 = vadd.f32 %v47, %v83
    %v112 = vadd.f32 %v48, %v87
    %v113 = vadd.f32 %v49, %v91
    %v114 = vadd.f32 %v50, %v95
    %v115 = vadd.f32 %v51, %v99
    %v116 = vlaneseq
    %v117 = vshrl.u32 %v116, 7
    %v118 = vlaneseq
    %v119 = vand.u32 %v118, 127
    %s120 = sld [smem:[#allocation2]]
    %v121 = vmul.u32 %v117, 2246822519
    %v122 = vxor.u32 %v121, 2654435761
    %v123 = vxor.u32 %v121, 1013904226
    %v124 = vxor.u32 %v121, 3668339987
    %v125 = vxor.u32 %v121, 2027808452
    %v126 = vxor.u32 %v121, 387276917
    %v127 = vxor.u32 %v121, 3041712678
    %v128 = vxor.u32 %v121, 1401181143
    %v129 = vmul.u32 %v119, 3266489917
    %v130 = vxor.u32 %v121, %v129
    %v131 = vxor.u32 %v122, %v129
    %v132 = vxor.u32 %v123, %v129
    %v133 = vxor.u32 %v124, %v129
    %v134 = vxor.u32 %v125, %v129
    %v135 = vxor.u32 %v126, %v129
    %v136 = vxor.u32 %v127, %v129
    %v137 = vxor.u32 %v128, %v129
    %s138 = smul.u32 %s120, 668265263
    %v139 = vstv %s138
    %v140 = vadd.s32 %v130, %v139
    %v141 = vadd.s32 %v131, %v139
    %v142 = vadd.s32 %v132, %v139
    %v143 = vadd.s32 %v133, %v139
    %v144 = vadd.s32 %v134, %v139
    %v145 = vadd.s32 %v135, %v139
    %v146 = vadd.s32 %v136, %v139
    %v147 = vadd.s32 %v137, %v139
    %s148 = smul.u32 0, 374761393
    %v149 = vstv %s148
    %v150 = vadd.s32 %v140, %v149
    %v151 = vadd.s32 %v141, %v149
    %v152 = vadd.s32 %v142, %v149
    %v153 = vadd.s32 %v143, %v149
    %v154 = vadd.s32 %v144, %v149
    %v155 = vadd.s32 %v145, %v149
    %v156 = vadd.s32 %v146, %v149
    %v157 = vadd.s32 %v147, %v149
    %v158 = vshrl.u32 %v150, 16
    %v159 = vshrl.u32 %v151, 16
    %v160 = vshrl.u32 %v152, 16
    %v161 = vshrl.u32 %v153, 16
    %v162 = vshrl.u32 %v154, 16
    %v163 = vshrl.u32 %v155, 16
    %v164 = vshrl.u32 %v156, 16
    %v165 = vshrl.u32 %v157, 16
    %v166 = vxor.u32 %v150, %v158
    %v167 = vxor.u32 %v151, %v159
    %v168 = vxor.u32 %v152, %v160
    %v169 = vxor.u32 %v153, %v161
    %v170 = vxor.u32 %v154, %v162
    %v171 = vxor.u32 %v155, %v163
    %v172 = vxor.u32 %v156, %v164
    %v173 = vxor.u32 %v157, %v165
    %v174 = vmul.u32 %v166, 2246822507
    %v175 = vmul.u32 %v167, 2246822507
    %v176 = vmul.u32 %v168, 2246822507
    %v177 = vmul.u32 %v169, 2246822507
    %v178 = vmul.u32 %v170, 2246822507
    %v179 = vmul.u32 %v171, 2246822507
    %v180 = vmul.u32 %v172, 2246822507
    %v181 = vmul.u32 %v173, 2246822507
    %v182 = vshrl.u32 %v174, 13
    %v183 = vshrl.u32 %v175, 13
    %v184 = vshrl.u32 %v176, 13
    %v185 = vshrl.u32 %v177, 13
    %v186 = vshrl.u32 %v178, 13
    %v187 = vshrl.u32 %v179, 13
    %v188 = vshrl.u32 %v180, 13
    %v189 = vshrl.u32 %v181, 13
    %v190 = vxor.u32 %v174, %v182
    %v191 = vxor.u32 %v175, %v183
    %v192 = vxor.u32 %v176, %v184
    %v193 = vxor.u32 %v177, %v185
    %v194 = vxor.u32 %v178, %v186
    %v195 = vxor.u32 %v179, %v187
    %v196 = vxor.u32 %v180, %v188
    %v197 = vxor.u32 %v181, %v189
    %v198 = vmul.u32 %v190, 3266489909
    %v199 = vmul.u32 %v191, 3266489909
    %v200 = vmul.u32 %v192, 3266489909
    %v201 = vmul.u32 %v193, 3266489909
    %v202 = vmul.u32 %v194, 3266489909
    %v203 = vmul.u32 %v195, 3266489909
    %v204 = vmul.u32 %v196, 3266489909
    %v205 = vmul.u32 %v197, 3266489909
    %v206 = vshrl.u32 %v198, 16
    %v207 = vshrl.u32 %v199, 16
    %v208 = vshrl.u32 %v200, 16
    %v209 = vshrl.u32 %v201, 16
    %v210 = vshrl.u32 %v202, 16
    %v211 = vshrl.u32 %v203, 16
    %v212 = vshrl.u32 %v204, 16
    %v213 = vshrl.u32 %v205, 16
    %v214 = vxor.u32 %v198, %v206
    %v215 = vxor.u32 %v199, %v207
    %v216 = vxor.u32 %v200, %v208
    %v217 = vxor.u32 %v201, %v209
    %v218 = vxor.u32 %v202, %v210
    %v219 = vxor.u32 %v203, %v211
    %v220 = vxor.u32 %v204, %v212
    %v221 = vxor.u32 %v205, %v213
    %vm222 = vcmp.ge.u32.totalorder %v214, 429496730
    %vm223 = vcmp.ge.u32.totalorder %v215, 429496730
    %vm224 = vcmp.ge.u32.totalorder %v216, 429496730
    %vm225 = vcmp.ge.u32.totalorder %v217, 429496730
    %vm226 = vcmp.ge.u32.totalorder %v218, 429496730
    %vm227 = vcmp.ge.u32.totalorder %v219, 429496730
    %vm228 = vcmp.ge.u32.totalorder %v220, 429496730
    %vm229 = vcmp.ge.u32.totalorder %v221, 429496730
    %v230 = vmul.f32 %v108, 1.1111112
    %v231 = vmul.f32 %v109, 1.1111112
    %v232 = vmul.f32 %v110, 1.1111112
    %v233 = vmul.f32 %v111, 1.1111112
    %v234 = vmul.f32 %v112, 1.1111112
    %v235 = vmul.f32 %v113, 1.1111112
    %v236 = vmul.f32 %v114, 1.1111112
    %v237 = vmul.f32 %v115, 1.1111112
    %v238 = vsel %vm222, %v230, 0.0
    %v239 = vsel %vm223, %v231, 0.0
    %v240 = vsel %vm224, %v232, 0.0
    %v241 = vsel %vm225, %v233, 0.0
    %v242 = vsel %vm226, %v234, 0.0
    %v243 = vsel %vm227, %v235, 0.0
    %v244 = vsel %vm228, %v236, 0.0
    %v245 = vsel %vm229, %v237, 0.0
    %vm246 = vcmask 254976
    %247 = vst.msk [vmem:[#allocation8] sm:$0x3] %vm246, %v238
    %248 = vst.msk [vmem:[#allocation8 + $0x2] sm:$0x3] %vm246, %v239
    %249 = vst.msk [vmem:[#allocation8 + $0x4] sm:$0x3] %vm246, %v240
    %250 = vst.msk [vmem:[#allocation8 + $0x6] sm:$0x3] %vm246, %v241
    %251 = vst.msk [vmem:[#allocation8 + $0x8] sm:$0x3] %vm246, %v242
    %252 = vst.msk [vmem:[#allocation8 + $0xa] sm:$0x3] %vm246, %v243
    %253 = vst.msk [vmem:[#allocation8 + $0xc] sm:$0x3] %vm246, %v244
    %254 = vst.msk [vmem:[#allocation8 + $0xe] sm:$0x3] %vm246, %v245
    // Predicated region
    $region22: #{tpu_custom_call.1} parent=1 // pred_check
      _
    $region23: #{tpu_custom_call.1} parent=1 // pred_check_branch
      %256 = sbr.rel (0) target = $region25
    $region24: #{tpu_custom_call.1} parent=1 // pred_region
      %s258 = ssub.s32 256, 256
      %259 = vsyncadd [#allocation5], %s258
      %s260 = sshll.u32 [#allocation8], 4
      %s261 = int_to_ptr.vmem [resolvable:$true] %s260
      %266 = dma.vmem_to_hbm [thread:$0]  %s261, 256, %s3, [#allocation5], 32, 32, 2
    $region25: #{tpu_custom_call.1} parent=1 // pred_fallthru
      _
    // Predicated region
    $region26: #{tpu_custom_call.1} parent=1 // pred_check
      _
    $region27: #{tpu_custom_call.1} parent=1 // pred_check_branch
      %268 = sbr.rel (0) target = $region29
    $region28: #{tpu_custom_call.1} parent=1 // pred_region
      %269 = dma.done [#allocation5], 256
    $region29: #{tpu_custom_call.1} parent=1 // pred_fallthru
      _
    %270 = vsyncpa [#allocation4], 1
    %271 = vsyncpa [#allocation7], 1
    %272 = vsyncpa [#allocation5], 1

</llo_original>
